<compile_context>
chip_gen: v5e
topology: v5e:2x2
jax: 0.10.0
libtpu: 0.0.40
codegen_flags: <defaults>
</compile_context>

<pallas_src>
import functools

import jax
import jax.numpy as jnp
from jax import lax
from jax.experimental import pallas as pl
from jax.experimental.pallas import tpu as pltpu

EPS = 1e-5  # PyTorch GroupNorm default eps

# slots inside the stacked banded-weight tensor
_CF1_A, _CF1_B, _CF2, _AG1_A, _AG1_B = 0, 1, 2, 3, 4


# ------------------------------- fused kernel -------------------------------

def _fused_kernel(text_ref, x_ref, img_ref, bw_ref, pq_ref, vec_ref,
                  o_ref, pad_a, pad_b, *, H, WC):
    f32 = jnp.float32
    bf16 = jnp.bfloat16

    # Only the two H-border rows must be zero ('same' padding along H); the
    # width padding is folded into the banded weight matrices and the interior
    # rows [1:H+1] are always overwritten below.  (Do NOT gate this on
    # program_id: with "parallel" semantics each core owns its scratch.)
    zrow = jnp.zeros((1, WC), f32)
    pad_a[0:1, :] = zrow
    pad_a[H + 1:H + 2, :] = zrow
    pad_b[0:1, :] = zrow
    pad_b[H + 1:H + 2, :] = zrow

    def slab(pad, kh):                       # (H, WC) bf16 MXU operand
        return pad[kh:kh + H, :].astype(bf16)

    def conv_pair(idx_a, idx_b, bias_row):   # 3x3 conv on channel-concat [A, B]
        acc = jnp.zeros((H, WC), f32)
        for kh in range(3):
            acc += jnp.dot(slab(pad_a, kh), bw_ref[idx_a, kh],
                           preferred_element_type=f32)
            acc += jnp.dot(slab(pad_b, kh), bw_ref[idx_b, kh],
                           preferred_element_type=f32)
        return acc + bias_row

    def conv_single(pad, idx, bias_row):     # 3x3 conv on a single C tensor
        acc = jnp.zeros((H, WC), f32)
        for kh in range(3):
            acc += jnp.dot(slab(pad, kh), bw_ref[idx, kh],
                           preferred_element_type=f32)
        return acc + bias_row

    def gn_silu(h, gamma_row, beta_row):     # GroupNorm(8) + SiLU (f32 VPU)
        s1 = jnp.sum(h, axis=0, keepdims=True)               # (1, WC)
        s2 = jnp.sum(h * h, axis=0, keepdims=True)
        mean_c = jnp.dot(s1, pq_ref[0], preferred_element_type=f32)
        ex2_c = jnp.dot(s2, pq_ref[0], preferred_element_type=f32)
        var_c = jnp.maximum(ex2_c - mean_c * mean_c, 0.0)     # no rsqrt(neg) NaN
        y = (h - mean_c) * lax.rsqrt(var_c + EPS)
        y = y * gamma_row + beta_row
        return y * jax.nn.sigmoid(y)

    cf_b1 = vec_ref[0:1, :]
    cf_gamma = vec_ref[1:2, :]
    cf_beta = vec_ref[2:3, :]
    cf_b2 = vec_ref[3:4, :]
    ag_b1 = vec_ref[4:5, :]
    ag_gamma = vec_ref[5:6, :]
    ag_beta = vec_ref[6:7, :]
    ag_b2 = vec_ref[7:8, :]

    x32 = x_ref[0]                           # (H, WC) f32
    img32 = img_ref[0]

    # ---- stage 1: text_img_fused = conv_fusion([text_spatial, img]) ----
    pad_a[1:H + 1, :] = jnp.broadcast_to(text_ref[0], (H, WC))
    pad_b[1:H + 1, :] = img32
    h = conv_pair(_CF1_A, _CF1_B, cf_b1)
    h = gn_silu(h, cf_gamma, cf_beta)
    pad_a[1:H + 1, :] = h
    tif = conv_single(pad_a, _CF2, cf_b2)

    # ---- stage 2: fused = conv_fusion([x, text_img_fused]) ----
    pad_a[1:H + 1, :] = x32
    pad_b[1:H + 1, :] = tif
    h = conv_pair(_CF1_A, _CF1_B, cf_b1)
    h = gn_silu(h, cf_gamma, cf_beta)
    pad_b[1:H + 1, :] = h                    # keep the x taps in pad_a
    fused = conv_single(pad_b, _CF2, cf_b2)

    # ---- stage 3: adaptive gate on [x, fused]; pad_a still holds x taps ----
    pad_b[1:H + 1, :] = fused
    hg = conv_pair(_AG1_A, _AG1_B, ag_b1)
    hg = gn_silu(hg, ag_gamma, ag_beta)
    # 1x1 conv (C->1) + broadcast back over channels == one block-diag matmul
    glogit = jnp.dot(hg, pq_ref[1], preferred_element_type=f32) + ag_b2
    gate = jax.nn.sigmoid(glogit)            # constant across C within a pixel

    o_ref[0] = x32 + gate * fused


# ------------------------------ pallas_call glue -----------------------------

def conditional_fusion_forward(x_nchw, text_features, img_nchw, p, groups=8):
    """is_shallow_layer=True, spatial_dims=2, both text and image conditions."""
    B, C, H, W = x_nchw.shape
    assert C % groups == 0
    WC = W * C
    f32 = jnp.float32
    bf16 = jnp.bfloat16

    def to_dense(a_nchw):                    # NCHW -> lane-dense (B, H, W*C)
        return jnp.transpose(a_nchw, (0, 2, 3, 1)).reshape(B, H, WC)

    x_d = to_dense(x_nchw).astype(f32)
    img_d = to_dense(img_nchw).astype(f32)

    # Hoisted text projection: the Linear and the token mean commute.
    tmean = jnp.einsum('bd,dc->bc', jnp.mean(text_features, axis=1), p['tp_w'],
                       precision=lax.Precision.HIGHEST) + p['tp_b']   # (B, C)
    text_d = jnp.tile(tmean, (1, W)).reshape(B, 1, WC).astype(f32)

    # Banded per-kh matrices: fold the 3 kw taps and the 'same' width padding
    # of a 3x3 conv into one (W*C, W*C) matrix per kernel row kh.
    wp = jnp.arange(W)[None, :, None]
    wo = jnp.arange(W)[None, None, :]
    kw = jnp.arange(3)[:, None, None]
    shift = (wp == wo + kw - 1).astype(f32)                   # (3, W, W)

    def banded(w_hwio):                      # (3,3,C,C) -> (3, W*C, W*C)
        def one(kh):
            m4 = jnp.einsum('kpw,kio->piwo', shift, w_hwio[kh].astype(f32))
            return m4.reshape(WC, WC)
        return jnp.stack([one(0), one(1), one(2)], axis=0)

    bw = jnp.stack([
        banded(p['cf_w1'][:, :, :C, :]),     # conv_fusion conv1, first-C half
        banded(p['cf_w1'][:, :, C:, :]),     # conv_fusion conv1, second-C half
        banded(p['cf_w2']),                  # conv_fusion conv2
        banded(p['ag_w1'][:, :, :C, :]),     # gate conv1, first-C half
        banded(p['ag_w1'][:, :, C:, :]),     # gate conv1, second-C half
    ], axis=0).astype(bf16)                  # (5, 3, WC, WC)

    # P: group-averaging matrix (GroupNorm stats).  Q: 1x1 gate conv (C->1)
    # plus broadcast back over channels, as one block-diagonal matrix.
    grp = jnp.arange(C) // (C // groups)
    ind = (grp[:, None] == grp[None, :]).astype(f32)          # (C, C)
    P = jnp.tile(ind, (W, W)) / float(H * W * (C // groups))  # (WC, WC)
    Q = jnp.kron(jnp.eye(W, dtype=f32),
                 jnp.broadcast_to(p['ag_w2'].reshape(C, 1), (C, C)))
    pq = jnp.stack([P, Q], axis=0)                            # (2, WC, WC) f32

    tile_c = lambda v: jnp.tile(v.reshape(C), W)
    vecs = jnp.stack([
        tile_c(p['cf_b1']), tile_c(p['cf_gamma']), tile_c(p['cf_beta']),
        tile_c(p['cf_b2']),
        tile_c(p['ag_b1']), tile_c(p['ag_gamma']), tile_c(p['ag_beta']),
        jnp.full((WC,), p['ag_b2'].reshape(())),
    ], axis=0).astype(f32)                                    # (8, WC)

    kernel = functools.partial(_fused_kernel, H=H, WC=WC)

    out_d = pl.pallas_call(
        kernel,
        out_shape=jax.ShapeDtypeStruct((B, H, WC), f32),
        grid=(B,),
        in_specs=[
            pl.BlockSpec((1, 1, WC), lambda b: (b, 0, 0)),          # text row
            pl.BlockSpec((1, H, WC), lambda b: (b, 0, 0)),          # x
            pl.BlockSpec((1, H, WC), lambda b: (b, 0, 0)),          # img
            pl.BlockSpec((5, 3, WC, WC), lambda b: (0, 0, 0, 0)),   # banded conv W
            pl.BlockSpec((2, WC, WC), lambda b: (0, 0, 0)),         # P, Q
            pl.BlockSpec((8, WC), lambda b: (0, 0)),                # bias/affine rows
        ],
        out_specs=pl.BlockSpec((1, H, WC), lambda b: (b, 0, 0)),
        scratch_shapes=[
            pltpu.VMEM((H + 2, WC), jnp.float32),                   # pad_a (H-padded)
            pltpu.VMEM((H + 2, WC), jnp.float32),                   # pad_b
        ],
        compiler_params=pltpu.CompilerParams(
            dimension_semantics=("parallel",)),
    )(text_d, x_d, img_d, bw, pq, vecs)

    return jnp.transpose(out_d.reshape(B, H, W, C), (0, 3, 1, 2))   # -> NCHW


# --------------------------------- parameters --------------------------------

def init_params(key, in_channels=16, text_dim=768):
    C = in_channels
    ks = jax.random.split(key, 10)
    s = 0.05
    p = {
        # nn.Linear(text_dim, C)
        'tp_w': jax.random.normal(ks[0], (text_dim, C)) * s,
        'tp_b': jax.random.normal(ks[1], (C,)) * s,
        # conv_fusion: Conv(2C->C,3x3) -> GroupNorm(8,C) -> SiLU -> Conv(C->C,3x3)
        'cf_w1': jax.random.normal(ks[2], (3, 3, 2 * C, C)) * s,
        'cf_b1': jax.random.normal(ks[3], (C,)) * s,
        'cf_gamma': jnp.ones((C,)),
        'cf_beta': jnp.zeros((C,)),
        'cf_w2': jax.random.normal(ks[4], (3, 3, C, C)) * s,
        'cf_b2': jax.random.normal(ks[5], (C,)) * s,
        # adaptive_gate.gate_conv: Conv(2C->C,3x3) -> GN(8,C) -> SiLU -> Conv(C->1,1x1) -> Sigmoid
        'ag_w1': jax.random.normal(ks[6], (3, 3, 2 * C, C)) * s,
        'ag_b1': jax.random.normal(ks[7], (C,)) * s,
        'ag_gamma': jnp.ones((C,)),
        'ag_beta': jnp.zeros((C,)),
        'ag_w2': jax.random.normal(ks[8], (C, 1)) * s,
        'ag_b2': jax.random.normal(ks[9], (1,)) * s,
    }
    return jax.tree.map(lambda a: a.astype(jnp.float32), p)


# ------------------------------ pure-JAX reference ---------------------------

def _ref_conv3x3(x, w, b):
    return lax.conv_general_dilated(
        x, w, window_strides=(1, 1), padding=((1, 1), (1, 1)),
        dimension_numbers=('NHWC', 'HWIO', 'NHWC'),
        precision=lax.Precision.HIGHEST) + b


def _ref_gn_silu(x, gamma, beta, groups):
    B, H, W, C = x.shape
    xg = x.reshape(B, H, W, groups, C // groups)
    mean = xg.mean(axis=(1, 2, 4), keepdims=True)
    var = ((xg - mean) ** 2).mean(axis=(1, 2, 4), keepdims=True)
    y = ((xg - mean) / jnp.sqrt(var + EPS)).reshape(B, H, W, C)
    y = y * gamma + beta
    return y * jax.nn.sigmoid(y)


def _ref_forward(x_nchw, text_features, img_nchw, p, groups=8):
    B, C, H, W = x_nchw.shape
    x = jnp.transpose(x_nchw, (0, 2, 3, 1))
    img = jnp.transpose(img_nchw, (0, 2, 3, 1))
    tf = jnp.einsum('bld,dc->blc', text_features, p['tp_w'],
                    precision=lax.Precision.HIGHEST) + p['tp_b']
    tm = jnp.mean(tf, axis=1)
    ts = jnp.broadcast_to(tm[:, None, None, :], (B, H, W, C))

    def cf(f):
        h = _ref_conv3x3(f, p['cf_w1'], p['cf_b1'])
        h = _ref_gn_silu(h, p['cf_gamma'], p['cf_beta'], groups)
        return _ref_conv3x3(h, p['cf_w2'], p['cf_b2'])

    tif = cf(jnp.concatenate([ts, img], axis=-1))
    fused = cf(jnp.concatenate([x, tif], axis=-1))
    h = _ref_conv3x3(jnp.concatenate([x, fused], axis=-1), p['ag_w1'], p['ag_b1'])
    h = _ref_gn_silu(h, p['ag_gamma'], p['ag_beta'], groups)
    gate = jax.nn.sigmoid(jnp.einsum('bhwc,co->bhwo', h, p['ag_w2'],
                                     precision=lax.Precision.HIGHEST) + p['ag_b2'])
    out = x + gate * fused
    return jnp.transpose(out, (0, 3, 1, 2))


# ------------------------------------ main -----------------------------------

if __name__ == "__main__":
    key = jax.random.PRNGKey(0)
    kx, kt, ki, kp = jax.random.split(key, 4)
    B, C, H, W, L, TD = 2, 16, 16, 16, 8, 768

    x = jax.random.normal(kx, (B, C, H, W), jnp.float32)      # network features (NCHW)
    text = jax.random.normal(kt, (B, L, TD), jnp.float32)     # text features
    img = jax.random.normal(ki, (B, C, H, W), jnp.float32)    # image features (NCHW)
    params = init_params(kp, in_channels=C, text_dim=TD)

    out = jax.jit(conditional_fusion_forward)(x, text, img, params)
    out = jax.block_until_ready(out)

    ref = _ref_forward(x, text, img, params)
    assert out.shape == (B, C, H, W)
    assert bool(jnp.all(jnp.isfinite(out)))
    max_err = float(jnp.max(jnp.abs(out - ref)))
    assert max_err < 5e-2, f"max abs err {max_err}"
    print("KERNEL_OK")
</pallas_src>

<mosaic_0001>
module attributes {stable_mosaic.version = 11 : i64} {
  func.func @_fused_kernel(%arg0: i32, %arg1: memref<1x1x256xf32, #tpu.memory_space<vmem>>, %arg2: memref<1x16x256xf32, #tpu.memory_space<vmem>>, %arg3: memref<1x16x256xf32, #tpu.memory_space<vmem>>, %arg4: memref<5x3x256x256xbf16, #tpu.memory_space<vmem>>, %arg5: memref<2x256x256xf32, #tpu.memory_space<vmem>>, %arg6: memref<8x256xf32, #tpu.memory_space<vmem>>, %arg7: memref<1x16x256xf32, #tpu.memory_space<vmem>>, %arg8: memref<18x256xf32, #tpu.memory_space<vmem>>, %arg9: memref<18x256xf32, #tpu.memory_space<vmem>>) attributes {dimension_semantics = [#tpu.dimension_semantics<parallel>], iteration_bounds = array<i64: 2>, scalar_prefetch = 0 : i64, scratch_operands = 2 : i64, tpu.core_type = #tpu.core_type<tc>, window_params = [{transform_indices = @transform_0, window_bounds = array<i64: 1, 1, 256>}, {transform_indices = @transform_1, window_bounds = array<i64: 1, 16, 256>}, {transform_indices = @transform_2, window_bounds = array<i64: 1, 16, 256>}, {pipeline_mode = #tpu.pipeline_mode<synchronous>, transform_indices = @transform_3, window_bounds = array<i64: 5, 3, 256, 256>}, {pipeline_mode = #tpu.pipeline_mode<synchronous>, transform_indices = @transform_4, window_bounds = array<i64: 2, 256, 256>}, {pipeline_mode = #tpu.pipeline_mode<synchronous>, transform_indices = @transform_5, window_bounds = array<i64: 8, 256>}, {transform_indices = @transform_6, window_bounds = array<i64: 1, 16, 256>}]} {
    %cst = arith.constant 0.000000e+00 : f32
    %0 = vector.broadcast %cst : f32 to vector<1x256xf32>
    %c0 = arith.constant 0 : index
    %c0_0 = arith.constant 0 : index
    %1 = vector.load %arg8[%c0, %c0_0] : memref<18x256xf32, #tpu.memory_space<vmem>>, vector<1x256xf32>
    tpu.vector_store %arg8[%c0, %c0_0], %0 {strides = array<i32>} : memref<18x256xf32, #tpu.memory_space<vmem>>, vector<1x256xf32>,
    %c17 = arith.constant 17 : index
    %c0_1 = arith.constant 0 : index
    %2 = vector.load %arg8[%c17, %c0_1] : memref<18x256xf32, #tpu.memory_space<vmem>>, vector<1x256xf32>
    tpu.vector_store %arg8[%c17, %c0_1], %0 {strides = array<i32>} : memref<18x256xf32, #tpu.memory_space<vmem>>, vector<1x256xf32>,
    %c0_2 = arith.constant 0 : index
    %c0_3 = arith.constant 0 : index
    %3 = vector.load %arg9[%c0_2, %c0_3] : memref<18x256xf32, #tpu.memory_space<vmem>>, vector<1x256xf32>
    tpu.vector_store %arg9[%c0_2, %c0_3], %0 {strides = array<i32>} : memref<18x256xf32, #tpu.memory_space<vmem>>, vector<1x256xf32>,
    %c17_4 = arith.constant 17 : index
    %c0_5 = arith.constant 0 : index
    %4 = vector.load %arg9[%c17_4, %c0_5] : memref<18x256xf32, #tpu.memory_space<vmem>>, vector<1x256xf32>
    tpu.vector_store %arg9[%c17_4, %c0_5], %0 {strides = array<i32>} : memref<18x256xf32, #tpu.memory_space<vmem>>, vector<1x256xf32>,
    %c0_6 = arith.constant 0 : index
    %c0_7 = arith.constant 0 : index
    %5 = vector.load %arg6[%c0_6, %c0_7] : memref<8x256xf32, #tpu.memory_space<vmem>>, vector<1x256xf32>
    %c1 = arith.constant 1 : index
    %c0_8 = arith.constant 0 : index
    %6 = vector.load %arg6[%c1, %c0_8] : memref<8x256xf32, #tpu.memory_space<vmem>>, vector<1x256xf32>
    %c2 = arith.constant 2 : index
    %c0_9 = arith.constant 0 : index
    %7 = vector.load %arg6[%c2, %c0_9] : memref<8x256xf32, #tpu.memory_space<vmem>>, vector<1x256xf32>
    %c3 = arith.constant 3 : index
    %c0_10 = arith.constant 0 : index
    %8 = vector.load %arg6[%c3, %c0_10] : memref<8x256xf32, #tpu.memory_space<vmem>>, vector<1x256xf32>
    %c4 = arith.constant 4 : index
    %c0_11 = arith.constant 0 : index
    %9 = vector.load %arg6[%c4, %c0_11] : memref<8x256xf32, #tpu.memory_space<vmem>>, vector<1x256xf32>
    %c5 = arith.constant 5 : index
    %c0_12 = arith.constant 0 : index
    %10 = vector.load %arg6[%c5, %c0_12] : memref<8x256xf32, #tpu.memory_space<vmem>>, vector<1x256xf32>
    %c6 = arith.constant 6 : index
    %c0_13 = arith.constant 0 : index
    %11 = vector.load %arg6[%c6, %c0_13] : memref<8x256xf32, #tpu.memory_space<vmem>>, vector<1x256xf32>
    %c7 = arith.constant 7 : index
    %c0_14 = arith.constant 0 : index
    %12 = vector.load %arg6[%c7, %c0_14] : memref<8x256xf32, #tpu.memory_space<vmem>>, vector<1x256xf32>
    %c0_15 = arith.constant 0 : index
    %c0_16 = arith.constant 0 : index
    %c0_17 = arith.constant 0 : index
    %13 = vector.load %arg2[%c0_15, %c0_16, %c0_17] : memref<1x16x256xf32, #tpu.memory_space<vmem>>, vector<1x16x256xf32>
    %14 = vector.shape_cast %13 : vector<1x16x256xf32> to vector<16x256xf32>
    %c0_18 = arith.constant 0 : index
    %c0_19 = arith.constant 0 : index
    %c0_20 = arith.constant 0 : index
    %15 = vector.load %arg3[%c0_18, %c0_19, %c0_20] : memref<1x16x256xf32, #tpu.memory_space<vmem>>, vector<1x16x256xf32>
    %16 = vector.shape_cast %15 : vector<1x16x256xf32> to vector<16x256xf32>
    %c0_21 = arith.constant 0 : index
    %c0_22 = arith.constant 0 : index
    %c0_23 = arith.constant 0 : index
    %17 = vector.load %arg1[%c0_21, %c0_22, %c0_23] : memref<1x1x256xf32, #tpu.memory_space<vmem>>, vector<1x1x256xf32>
    %18 = vector.shape_cast %17 : vector<1x1x256xf32> to vector<1x256xf32>
    %19 = vector.shape_cast %18 : vector<1x256xf32> to vector<1x256xf32>
    %20 = vector.broadcast %19 : vector<1x256xf32> to vector<16x256xf32>
    %c1_24 = arith.constant 1 : index
    %c0_25 = arith.constant 0 : index
    %21 = vector.load %arg8[%c1_24, %c0_25] : memref<18x256xf32, #tpu.memory_space<vmem>>, vector<16x256xf32>
    tpu.vector_store %arg8[%c1_24, %c0_25], %20 {strides = array<i32>} : memref<18x256xf32, #tpu.memory_space<vmem>>, vector<16x256xf32>,
    %c1_26 = arith.constant 1 : index
    %c0_27 = arith.constant 0 : index
    %22 = vector.load %arg9[%c1_26, %c0_27] : memref<18x256xf32, #tpu.memory_space<vmem>>, vector<16x256xf32>
    tpu.vector_store %arg9[%c1_26, %c0_27], %16 {strides = array<i32>} : memref<18x256xf32, #tpu.memory_space<vmem>>, vector<16x256xf32>,
    %cst_28 = arith.constant 0.000000e+00 : f32
    %23 = vector.broadcast %cst_28 : f32 to vector<16x256xf32>
    %c0_29 = arith.constant 0 : index
    %c0_30 = arith.constant 0 : index
    %24 = vector.load %arg8[%c0_29, %c0_30] : memref<18x256xf32, #tpu.memory_space<vmem>>, vector<16x256xf32>
    %25 = arith.truncf %24 : vector<16x256xf32> to vector<16x256xbf16>
    %c0_31 = arith.constant 0 : index
    %c0_32 = arith.constant 0 : index
    %c0_33 = arith.constant 0 : index
    %c0_34 = arith.constant 0 : index
    %26 = vector.load %arg4[%c0_31, %c0_32, %c0_33, %c0_34] : memref<5x3x256x256xbf16, #tpu.memory_space<vmem>>, vector<1x1x256x256xbf16>
    %27 = vector.shape_cast %26 : vector<1x1x256x256xbf16> to vector<256x256xbf16>
    %cst_35 = arith.constant dense<0.000000e+00> : vector<16x256xf32>
    %28 = tpu.matmul %25, %27, %cst_35 {dimension_numbers = #tpu.dot_dimension_numbers<[1], [0], [0], [1], [0, 0, 1, 1], [], []>} : vector<16x256xbf16>, vector<256x256xbf16>, vector<16x256xf32> -> vector<16x256xf32>
    %29 = arith.addf %23, %28 : vector<16x256xf32>
    %c0_36 = arith.constant 0 : index
    %c0_37 = arith.constant 0 : index
    %30 = vector.load %arg9[%c0_36, %c0_37] : memref<18x256xf32, #tpu.memory_space<vmem>>, vector<16x256xf32>
    %31 = arith.truncf %30 : vector<16x256xf32> to vector<16x256xbf16>
    %c1_38 = arith.constant 1 : index
    %c0_39 = arith.constant 0 : index
    %c0_40 = arith.constant 0 : index
    %c0_41 = arith.constant 0 : index
    %32 = vector.load %arg4[%c1_38, %c0_39, %c0_40, %c0_41] : memref<5x3x256x256xbf16, #tpu.memory_space<vmem>>, vector<1x1x256x256xbf16>
    %33 = vector.shape_cast %32 : vector<1x1x256x256xbf16> to vector<256x256xbf16>
    %cst_42 = arith.constant dense<0.000000e+00> : vector<16x256xf32>
    %34 = tpu.matmul %31, %33, %cst_42 {dimension_numbers = #tpu.dot_dimension_numbers<[1], [0], [0], [1], [0, 0, 1, 1], [], []>} : vector<16x256xbf16>, vector<256x256xbf16>, vector<16x256xf32> -> vector<16x256xf32>
    %35 = arith.addf %29, %34 : vector<16x256xf32>
    %c1_43 = arith.constant 1 : index
    %c0_44 = arith.constant 0 : index
    %36 = vector.load %arg8[%c1_43, %c0_44] : memref<18x256xf32, #tpu.memory_space<vmem>>, vector<16x256xf32>
    %37 = arith.truncf %36 : vector<16x256xf32> to vector<16x256xbf16>
    %c0_45 = arith.constant 0 : index
    %c1_46 = arith.constant 1 : index
    %c0_47 = arith.constant 0 : index
    %c0_48 = arith.constant 0 : index
    %38 = vector.load %arg4[%c0_45, %c1_46, %c0_47, %c0_48] : memref<5x3x256x256xbf16, #tpu.memory_space<vmem>>, vector<1x1x256x256xbf16>
    %39 = vector.shape_cast %38 : vector<1x1x256x256xbf16> to vector<256x256xbf16>
    %cst_49 = arith.constant dense<0.000000e+00> : vector<16x256xf32>
    %40 = tpu.matmul %37, %39, %cst_49 {dimension_numbers = #tpu.dot_dimension_numbers<[1], [0], [0], [1], [0, 0, 1, 1], [], []>} : vector<16x256xbf16>, vector<256x256xbf16>, vector<16x256xf32> -> vector<16x256xf32>
    %41 = arith.addf %35, %40 : vector<16x256xf32>
    %c1_50 = arith.constant 1 : index
    %c0_51 = arith.constant 0 : index
    %42 = vector.load %arg9[%c1_50, %c0_51] : memref<18x256xf32, #tpu.memory_space<vmem>>, vector<16x256xf32>
    %43 = arith.truncf %42 : vector<16x256xf32> to vector<16x256xbf16>
    %c1_52 = arith.constant 1 : index
    %c1_53 = arith.constant 1 : index
    %c0_54 = arith.constant 0 : index
    %c0_55 = arith.constant 0 : index
    %44 = vector.load %arg4[%c1_52, %c1_53, %c0_54, %c0_55] : memref<5x3x256x256xbf16, #tpu.memory_space<vmem>>, vector<1x1x256x256xbf16>
    %45 = vector.shape_cast %44 : vector<1x1x256x256xbf16> to vector<256x256xbf16>
    %cst_56 = arith.constant dense<0.000000e+00> : vector<16x256xf32>
    %46 = tpu.matmul %43, %45, %cst_56 {dimension_numbers = #tpu.dot_dimension_numbers<[1], [0], [0], [1], [0, 0, 1, 1], [], []>} : vector<16x256xbf16>, vector<256x256xbf16>, vector<16x256xf32> -> vector<16x256xf32>
    %47 = arith.addf %41, %46 : vector<16x256xf32>
    %c2_57 = arith.constant 2 : index
    %c0_58 = arith.constant 0 : index
    %48 = vector.load %arg8[%c2_57, %c0_58] : memref<18x256xf32, #tpu.memory_space<vmem>>, vector<16x256xf32>
    %49 = arith.truncf %48 : vector<16x256xf32> to vector<16x256xbf16>
    %c0_59 = arith.constant 0 : index
    %c2_60 = arith.constant 2 : index
    %c0_61 = arith.constant 0 : index
    %c0_62 = arith.constant 0 : index
    %50 = vector.load %arg4[%c0_59, %c2_60, %c0_61, %c0_62] : memref<5x3x256x256xbf16, #tpu.memory_space<vmem>>, vector<1x1x256x256xbf16>
    %51 = vector.shape_cast %50 : vector<1x1x256x256xbf16> to vector<256x256xbf16>
    %cst_63 = arith.constant dense<0.000000e+00> : vector<16x256xf32>
    %52 = tpu.matmul %49, %51, %cst_63 {dimension_numbers = #tpu.dot_dimension_numbers<[1], [0], [0], [1], [0, 0, 1, 1], [], []>} : vector<16x256xbf16>, vector<256x256xbf16>, vector<16x256xf32> -> vector<16x256xf32>
    %53 = arith.addf %47, %52 : vector<16x256xf32>
    %c2_64 = arith.constant 2 : index
    %c0_65 = arith.constant 0 : index
    %54 = vector.load %arg9[%c2_64, %c0_65] : memref<18x256xf32, #tpu.memory_space<vmem>>, vector<16x256xf32>
    %55 = arith.truncf %54 : vector<16x256xf32> to vector<16x256xbf16>
    %c1_66 = arith.constant 1 : index
    %c2_67 = arith.constant 2 : index
    %c0_68 = arith.constant 0 : index
    %c0_69 = arith.constant 0 : index
    %56 = vector.load %arg4[%c1_66, %c2_67, %c0_68, %c0_69] : memref<5x3x256x256xbf16, #tpu.memory_space<vmem>>, vector<1x1x256x256xbf16>
    %57 = vector.shape_cast %56 : vector<1x1x256x256xbf16> to vector<256x256xbf16>
    %cst_70 = arith.constant dense<0.000000e+00> : vector<16x256xf32>
    %58 = tpu.matmul %55, %57, %cst_70 {dimension_numbers = #tpu.dot_dimension_numbers<[1], [0], [0], [1], [0, 0, 1, 1], [], []>} : vector<16x256xbf16>, vector<256x256xbf16>, vector<16x256xf32> -> vector<16x256xf32>
    %59 = arith.addf %53, %58 : vector<16x256xf32>
    %60 = vector.broadcast %5 : vector<1x256xf32> to vector<16x256xf32>
    %61 = arith.addf %59, %60 : vector<16x256xf32>
    %cst_71 = arith.constant dense<0.000000e+00> : vector<256xf32>
    %62 = vector.multi_reduction <add>, %61, %cst_71 [0] : vector<16x256xf32> to vector<256xf32>
    %63 = vector.shape_cast %62 : vector<256xf32> to vector<1x256xf32>
    %64 = arith.mulf %61, %61 : vector<16x256xf32>
    %cst_72 = arith.constant dense<0.000000e+00> : vector<256xf32>
    %65 = vector.multi_reduction <add>, %64, %cst_72 [0] : vector<16x256xf32> to vector<256xf32>
    %66 = vector.shape_cast %65 : vector<256xf32> to vector<1x256xf32>
    %c0_73 = arith.constant 0 : index
    %c0_74 = arith.constant 0 : index
    %c0_75 = arith.constant 0 : index
    %67 = vector.load %arg5[%c0_73, %c0_74, %c0_75] : memref<2x256x256xf32, #tpu.memory_space<vmem>>, vector<1x256x256xf32>
    %68 = vector.shape_cast %67 : vector<1x256x256xf32> to vector<256x256xf32>
    %cst_76 = arith.constant dense<0.000000e+00> : vector<1x256xf32>
    %69 = tpu.matmul %63, %68, %cst_76 {dimension_numbers = #tpu.dot_dimension_numbers<[1], [0], [0], [1], [0, 0, 1, 1], [], []>} : vector<1x256xf32>, vector<256x256xf32>, vector<1x256xf32> -> vector<1x256xf32>
    %c0_77 = arith.constant 0 : index
    %c0_78 = arith.constant 0 : index
    %c0_79 = arith.constant 0 : index
    %70 = vector.load %arg5[%c0_77, %c0_78, %c0_79] : memref<2x256x256xf32, #tpu.memory_space<vmem>>, vector<1x256x256xf32>
    %71 = vector.shape_cast %70 : vector<1x256x256xf32> to vector<256x256xf32>
    %cst_80 = arith.constant dense<0.000000e+00> : vector<1x256xf32>
    %72 = tpu.matmul %66, %71, %cst_80 {dimension_numbers = #tpu.dot_dimension_numbers<[1], [0], [0], [1], [0, 0, 1, 1], [], []>} : vector<1x256xf32>, vector<256x256xf32>, vector<1x256xf32> -> vector<1x256xf32>
    %73 = arith.mulf %69, %69 : vector<1x256xf32>
    %74 = arith.subf %72, %73 : vector<1x256xf32>
    %cst_81 = arith.constant 0.000000e+00 : f32
    %75 = vector.broadcast %cst_81 : f32 to vector<1x256xf32>
    %76 = arith.maximumf %74, %75 : vector<1x256xf32>
    %77 = vector.broadcast %69 : vector<1x256xf32> to vector<16x256xf32>
    %78 = arith.subf %61, %77 : vector<16x256xf32>
    %cst_82 = arith.constant 9.99999974E-6 : f32
    %79 = vector.broadcast %cst_82 : f32 to vector<1x256xf32>
    %80 = arith.addf %76, %79 : vector<1x256xf32>
    %81 = math.rsqrt %80 : vector<1x256xf32>
    %82 = vector.broadcast %81 : vector<1x256xf32> to vector<16x256xf32>
    %83 = arith.mulf %78, %82 : vector<16x256xf32>
    %84 = vector.broadcast %6 : vector<1x256xf32> to vector<16x256xf32>
    %85 = arith.mulf %83, %84 : vector<16x256xf32>
    %86 = vector.broadcast %7 : vector<1x256xf32> to vector<16x256xf32>
    %87 = arith.addf %85, %86 : vector<16x256xf32>
    %88 = arith.negf %87 : vector<16x256xf32>
    %89 = math.exp %88 : vector<16x256xf32>
    %cst_83 = arith.constant 1.000000e+00 : f32
    %90 = vector.broadcast %cst_83 : f32 to vector<16x256xf32>
    %91 = arith.addf %90, %89 : vector<16x256xf32>
    %92 = arith.divf %90, %91 : vector<16x256xf32>
    %93 = arith.mulf %87, %92 : vector<16x256xf32>
    %c1_84 = arith.constant 1 : index
    %c0_85 = arith.constant 0 : index
    %94 = vector.load %arg8[%c1_84, %c0_85] : memref<18x256xf32, #tpu.memory_space<vmem>>, vector<16x256xf32>
    tpu.vector_store %arg8[%c1_84, %c0_85], %93 {strides = array<i32>} : memref<18x256xf32, #tpu.memory_space<vmem>>, vector<16x256xf32>,
    %cst_86 = arith.constant 0.000000e+00 : f32
    %95 = vector.broadcast %cst_86 : f32 to vector<16x256xf32>
    %c0_87 = arith.constant 0 : index
    %c0_88 = arith.constant 0 : index
    %96 = vector.load %arg8[%c0_87, %c0_88] : memref<18x256xf32, #tpu.memory_space<vmem>>, vector<16x256xf32>
    %97 = arith.truncf %96 : vector<16x256xf32> to vector<16x256xbf16>
    %c2_89 = arith.constant 2 : index
    %c0_90 = arith.constant 0 : index
    %c0_91 = arith.constant 0 : index
    %c0_92 = arith.constant 0 : index
    %98 = vector.load %arg4[%c2_89, %c0_90, %c0_91, %c0_92] : memref<5x3x256x256xbf16, #tpu.memory_space<vmem>>, vector<1x1x256x256xbf16>
    %99 = vector.shape_cast %98 : vector<1x1x256x256xbf16> to vector<256x256xbf16>
    %cst_93 = arith.constant dense<0.000000e+00> : vector<16x256xf32>
    %100 = tpu.matmul %97, %99, %cst_93 {dimension_numbers = #tpu.dot_dimension_numbers<[1], [0], [0], [1], [0, 0, 1, 1], [], []>} : vector<16x256xbf16>, vector<256x256xbf16>, vector<16x256xf32> -> vector<16x256xf32>
    %101 = arith.addf %95, %100 : vector<16x256xf32>
    %c1_94 = arith.constant 1 : index
    %c0_95 = arith.constant 0 : index
    %102 = vector.load %arg8[%c1_94, %c0_95] : memref<18x256xf32, #tpu.memory_space<vmem>>, vector<16x256xf32>
    %103 = arith.truncf %102 : vector<16x256xf32> to vector<16x256xbf16>
    %c2_96 = arith.constant 2 : index
    %c1_97 = arith.constant 1 : index
    %c0_98 = arith.constant 0 : index
    %c0_99 = arith.constant 0 : index
    %104 = vector.load %arg4[%c2_96, %c1_97, %c0_98, %c0_99] : memref<5x3x256x256xbf16, #tpu.memory_space<vmem>>, vector<1x1x256x256xbf16>
    %105 = vector.shape_cast %104 : vector<1x1x256x256xbf16> to vector<256x256xbf16>
    %cst_100 = arith.constant dense<0.000000e+00> : vector<16x256xf32>
    %106 = tpu.matmul %103, %105, %cst_100 {dimension_numbers = #tpu.dot_dimension_numbers<[1], [0], [0], [1], [0, 0, 1, 1], [], []>} : vector<16x256xbf16>, vector<256x256xbf16>, vector<16x256xf32> -> vector<16x256xf32>
    %107 = arith.addf %101, %106 : vector<16x256xf32>
    %c2_101 = arith.constant 2 : index
    %c0_102 = arith.constant 0 : index
    %108 = vector.load %arg8[%c2_101, %c0_102] : memref<18x256xf32, #tpu.memory_space<vmem>>, vector<16x256xf32>
    %109 = arith.truncf %108 : vector<16x256xf32> to vector<16x256xbf16>
    %c2_103 = arith.constant 2 : index
    %c2_104 = arith.constant 2 : index
    %c0_105 = arith.constant 0 : index
    %c0_106 = arith.constant 0 : index
    %110 = vector.load %arg4[%c2_103, %c2_104, %c0_105, %c0_106] : memref<5x3x256x256xbf16, #tpu.memory_space<vmem>>, vector<1x1x256x256xbf16>
    %111 = vector.shape_cast %110 : vector<1x1x256x256xbf16> to vector<256x256xbf16>
    %cst_107 = arith.constant dense<0.000000e+00> : vector<16x256xf32>
    %112 = tpu.matmul %109, %111, %cst_107 {dimension_numbers = #tpu.dot_dimension_numbers<[1], [0], [0], [1], [0, 0, 1, 1], [], []>} : vector<16x256xbf16>, vector<256x256xbf16>, vector<16x256xf32> -> vector<16x256xf32>
    %113 = arith.addf %107, %112 : vector<16x256xf32>
    %114 = vector.broadcast %8 : vector<1x256xf32> to vector<16x256xf32>
    %115 = arith.addf %113, %114 : vector<16x256xf32>
    %c1_108 = arith.constant 1 : index
    %c0_109 = arith.constant 0 : index
    %116 = vector.load %arg8[%c1_108, %c0_109] : memref<18x256xf32, #tpu.memory_space<vmem>>, vector<16x256xf32>
    tpu.vector_store %arg8[%c1_108, %c0_109], %14 {strides = array<i32>} : memref<18x256xf32, #tpu.memory_space<vmem>>, vector<16x256xf32>,
    %c1_110 = arith.constant 1 : index
    %c0_111 = arith.constant 0 : index
    %117 = vector.load %arg9[%c1_110, %c0_111] : memref<18x256xf32, #tpu.memory_space<vmem>>, vector<16x256xf32>
    tpu.vector_store %arg9[%c1_110, %c0_111], %115 {strides = array<i32>} : memref<18x256xf32, #tpu.memory_space<vmem>>, vector<16x256xf32>,
    %cst_112 = arith.constant 0.000000e+00 : f32
    %118 = vector.broadcast %cst_112 : f32 to vector<16x256xf32>
    %c0_113 = arith.constant 0 : index
    %c0_114 = arith.constant 0 : index
    %119 = vector.load %arg8[%c0_113, %c0_114] : memref<18x256xf32, #tpu.memory_space<vmem>>, vector<16x256xf32>
    %120 = arith.truncf %119 : vector<16x256xf32> to vector<16x256xbf16>
    %c0_115 = arith.constant 0 : index
    %c0_116 = arith.constant 0 : index
    %c0_117 = arith.constant 0 : index
    %c0_118 = arith.constant 0 : index
    %121 = vector.load %arg4[%c0_115, %c0_116, %c0_117, %c0_118] : memref<5x3x256x256xbf16, #tpu.memory_space<vmem>>, vector<1x1x256x256xbf16>
    %122 = vector.shape_cast %121 : vector<1x1x256x256xbf16> to vector<256x256xbf16>
    %cst_119 = arith.constant dense<0.000000e+00> : vector<16x256xf32>
    %123 = tpu.matmul %120, %122, %cst_119 {dimension_numbers = #tpu.dot_dimension_numbers<[1], [0], [0], [1], [0, 0, 1, 1], [], []>} : vector<16x256xbf16>, vector<256x256xbf16>, vector<16x256xf32> -> vector<16x256xf32>
    %124 = arith.addf %118, %123 : vector<16x256xf32>
    %c0_120 = arith.constant 0 : index
    %c0_121 = arith.constant 0 : index
    %125 = vector.load %arg9[%c0_120, %c0_121] : memref<18x256xf32, #tpu.memory_space<vmem>>, vector<16x256xf32>
    %126 = arith.truncf %125 : vector<16x256xf32> to vector<16x256xbf16>
    %c1_122 = arith.constant 1 : index
    %c0_123 = arith.constant 0 : index
    %c0_124 = arith.constant 0 : index
    %c0_125 = arith.constant 0 : index
    %127 = vector.load %arg4[%c1_122, %c0_123, %c0_124, %c0_125] : memref<5x3x256x256xbf16, #tpu.memory_space<vmem>>, vector<1x1x256x256xbf16>
    %128 = vector.shape_cast %127 : vector<1x1x256x256xbf16> to vector<256x256xbf16>
    %cst_126 = arith.constant dense<0.000000e+00> : vector<16x256xf32>
    %129 = tpu.matmul %126, %128, %cst_126 {dimension_numbers = #tpu.dot_dimension_numbers<[1], [0], [0], [1], [0, 0, 1, 1], [], []>} : vector<16x256xbf16>, vector<256x256xbf16>, vector<16x256xf32> -> vector<16x256xf32>
    %130 = arith.addf %124, %129 : vector<16x256xf32>
    %c1_127 = arith.constant 1 : index
    %c0_128 = arith.constant 0 : index
    %131 = vector.load %arg8[%c1_127, %c0_128] : memref<18x256xf32, #tpu.memory_space<vmem>>, vector<16x256xf32>
    %132 = arith.truncf %131 : vector<16x256xf32> to vector<16x256xbf16>
    %c0_129 = arith.constant 0 : index
    %c1_130 = arith.constant 1 : index
    %c0_131 = arith.constant 0 : index
    %c0_132 = arith.constant 0 : index
    %133 = vector.load %arg4[%c0_129, %c1_130, %c0_131, %c0_132] : memref<5x3x256x256xbf16, #tpu.memory_space<vmem>>, vector<1x1x256x256xbf16>
    %134 = vector.shape_cast %133 : vector<1x1x256x256xbf16> to vector<256x256xbf16>
    %cst_133 = arith.constant dense<0.000000e+00> : vector<16x256xf32>
    %135 = tpu.matmul %132, %134, %cst_133 {dimension_numbers = #tpu.dot_dimension_numbers<[1], [0], [0], [1], [0, 0, 1, 1], [], []>} : vector<16x256xbf16>, vector<256x256xbf16>, vector<16x256xf32> -> vector<16x256xf32>
    %136 = arith.addf %130, %135 : vector<16x256xf32>
    %c1_134 = arith.constant 1 : index
    %c0_135 = arith.constant 0 : index
    %137 = vector.load %arg9[%c1_134, %c0_135] : memref<18x256xf32, #tpu.memory_space<vmem>>, vector<16x256xf32>
    %138 = arith.truncf %137 : vector<16x256xf32> to vector<16x256xbf16>
    %c1_136 = arith.constant 1 : index
    %c1_137 = arith.constant 1 : index
    %c0_138 = arith.constant 0 : index
    %c0_139 = arith.constant 0 : index
    %139 = vector.load %arg4[%c1_136, %c1_137, %c0_138, %c0_139] : memref<5x3x256x256xbf16, #tpu.memory_space<vmem>>, vector<1x1x256x256xbf16>
    %140 = vector.shape_cast %139 : vector<1x1x256x256xbf16> to vector<256x256xbf16>
    %cst_140 = arith.constant dense<0.000000e+00> : vector<16x256xf32>
    %141 = tpu.matmul %138, %140, %cst_140 {dimension_numbers = #tpu.dot_dimension_numbers<[1], [0], [0], [1], [0, 0, 1, 1], [], []>} : vector<16x256xbf16>, vector<256x256xbf16>, vector<16x256xf32> -> vector<16x256xf32>
    %142 = arith.addf %136, %141 : vector<16x256xf32>
    %c2_141 = arith.constant 2 : index
    %c0_142 = arith.constant 0 : index
    %143 = vector.load %arg8[%c2_141, %c0_142] : memref<18x256xf32, #tpu.memory_space<vmem>>, vector<16x256xf32>
    %144 = arith.truncf %143 : vector<16x256xf32> to vector<16x256xbf16>
    %c0_143 = arith.constant 0 : index
    %c2_144 = arith.constant 2 : index
    %c0_145 = arith.constant 0 : index
    %c0_146 = arith.constant 0 : index
    %145 = vector.load %arg4[%c0_143, %c2_144, %c0_145, %c0_146] : memref<5x3x256x256xbf16, #tpu.memory_space<vmem>>, vector<1x1x256x256xbf16>
    %146 = vector.shape_cast %145 : vector<1x1x256x256xbf16> to vector<256x256xbf16>
    %cst_147 = arith.constant dense<0.000000e+00> : vector<16x256xf32>
    %147 = tpu.matmul %144, %146, %cst_147 {dimension_numbers = #tpu.dot_dimension_numbers<[1], [0], [0], [1], [0, 0, 1, 1], [], []>} : vector<16x256xbf16>, vector<256x256xbf16>, vector<16x256xf32> -> vector<16x256xf32>
    %148 = arith.addf %142, %147 : vector<16x256xf32>
    %c2_148 = arith.constant 2 : index
    %c0_149 = arith.constant 0 : index
    %149 = vector.load %arg9[%c2_148, %c0_149] : memref<18x256xf32, #tpu.memory_space<vmem>>, vector<16x256xf32>
    %150 = arith.truncf %149 : vector<16x256xf32> to vector<16x256xbf16>
    %c1_150 = arith.constant 1 : index
    %c2_151 = arith.constant 2 : index
    %c0_152 = arith.constant 0 : index
    %c0_153 = arith.constant 0 : index
    %151 = vector.load %arg4[%c1_150, %c2_151, %c0_152, %c0_153] : memref<5x3x256x256xbf16, #tpu.memory_space<vmem>>, vector<1x1x256x256xbf16>
    %152 = vector.shape_cast %151 : vector<1x1x256x256xbf16> to vector<256x256xbf16>
    %cst_154 = arith.constant dense<0.000000e+00> : vector<16x256xf32>
    %153 = tpu.matmul %150, %152, %cst_154 {dimension_numbers = #tpu.dot_dimension_numbers<[1], [0], [0], [1], [0, 0, 1, 1], [], []>} : vector<16x256xbf16>, vector<256x256xbf16>, vector<16x256xf32> -> vector<16x256xf32>
    %154 = arith.addf %148, %153 : vector<16x256xf32>
    %155 = vector.broadcast %5 : vector<1x256xf32> to vector<16x256xf32>
    %156 = arith.addf %154, %155 : vector<16x256xf32>
    %cst_155 = arith.constant dense<0.000000e+00> : vector<256xf32>
    %157 = vector.multi_reduction <add>, %156, %cst_155 [0] : vector<16x256xf32> to vector<256xf32>
    %158 = vector.shape_cast %157 : vector<256xf32> to vector<1x256xf32>
    %159 = arith.mulf %156, %156 : vector<16x256xf32>
    %cst_156 = arith.constant dense<0.000000e+00> : vector<256xf32>
    %160 = vector.multi_reduction <add>, %159, %cst_156 [0] : vector<16x256xf32> to vector<256xf32>
    %161 = vector.shape_cast %160 : vector<256xf32> to vector<1x256xf32>
    %c0_157 = arith.constant 0 : index
    %c0_158 = arith.constant 0 : index
    %c0_159 = arith.constant 0 : index
    %162 = vector.load %arg5[%c0_157, %c0_158, %c0_159] : memref<2x256x256xf32, #tpu.memory_space<vmem>>, vector<1x256x256xf32>
    %163 = vector.shape_cast %162 : vector<1x256x256xf32> to vector<256x256xf32>
    %cst_160 = arith.constant dense<0.000000e+00> : vector<1x256xf32>
    %164 = tpu.matmul %158, %163, %cst_160 {dimension_numbers = #tpu.dot_dimension_numbers<[1], [0], [0], [1], [0, 0, 1, 1], [], []>} : vector<1x256xf32>, vector<256x256xf32>, vector<1x256xf32> -> vector<1x256xf32>
    %c0_161 = arith.constant 0 : index
    %c0_162 = arith.constant 0 : index
    %c0_163 = arith.constant 0 : index
    %165 = vector.load %arg5[%c0_161, %c0_162, %c0_163] : memref<2x256x256xf32, #tpu.memory_space<vmem>>, vector<1x256x256xf32>
    %166 = vector.shape_cast %165 : vector<1x256x256xf32> to vector<256x256xf32>
    %cst_164 = arith.constant dense<0.000000e+00> : vector<1x256xf32>
    %167 = tpu.matmul %161, %166, %cst_164 {dimension_numbers = #tpu.dot_dimension_numbers<[1], [0], [0], [1], [0, 0, 1, 1], [], []>} : vector<1x256xf32>, vector<256x256xf32>, vector<1x256xf32> -> vector<1x256xf32>
    %168 = arith.mulf %164, %164 : vector<1x256xf32>
    %169 = arith.subf %167, %168 : vector<1x256xf32>
    %cst_165 = arith.constant 0.000000e+00 : f32
    %170 = vector.broadcast %cst_165 : f32 to vector<1x256xf32>
    %171 = arith.maximumf %169, %170 : vector<1x256xf32>
    %172 = vector.broadcast %164 : vector<1x256xf32> to vector<16x256xf32>
    %173 = arith.subf %156, %172 : vector<16x256xf32>
    %cst_166 = arith.constant 9.99999974E-6 : f32
    %174 = vector.broadcast %cst_166 : f32 to vector<1x256xf32>
    %175 = arith.addf %171, %174 : vector<1x256xf32>
    %176 = math.rsqrt %175 : vector<1x256xf32>
    %177 = vector.broadcast %176 : vector<1x256xf32> to vector<16x256xf32>
    %178 = arith.mulf %173, %177 : vector<16x256xf32>
    %179 = vector.broadcast %6 : vector<1x256xf32> to vector<16x256xf32>
    %180 = arith.mulf %178, %179 : vector<16x256xf32>
    %181 = vector.broadcast %7 : vector<1x256xf32> to vector<16x256xf32>
    %182 = arith.addf %180, %181 : vector<16x256xf32>
    %183 = arith.negf %182 : vector<16x256xf32>
    %184 = math.exp %183 : vector<16x256xf32>
    %cst_167 = arith.constant 1.000000e+00 : f32
    %185 = vector.broadcast %cst_167 : f32 to vector<16x256xf32>
    %186 = arith.addf %185, %184 : vector<16x256xf32>
    %187 = arith.divf %185, %186 : vector<16x256xf32>
    %188 = arith.mulf %182, %187 : vector<16x256xf32>
    %c1_168 = arith.constant 1 : index
    %c0_169 = arith.constant 0 : index
    %189 = vector.load %arg9[%c1_168, %c0_169] : memref<18x256xf32, #tpu.memory_space<vmem>>, vector<16x256xf32>
    tpu.vector_store %arg9[%c1_168, %c0_169], %188 {strides = array<i32>} : memref<18x256xf32, #tpu.memory_space<vmem>>, vector<16x256xf32>,
    %cst_170 = arith.constant 0.000000e+00 : f32
    %190 = vector.broadcast %cst_170 : f32 to vector<16x256xf32>
    %c0_171 = arith.constant 0 : index
    %c0_172 = arith.constant 0 : index
    %191 = vector.load %arg9[%c0_171, %c0_172] : memref<18x256xf32, #tpu.memory_space<vmem>>, vector<16x256xf32>
    %192 = arith.truncf %191 : vector<16x256xf32> to vector<16x256xbf16>
    %c2_173 = arith.constant 2 : index
    %c0_174 = arith.constant 0 : index
    %c0_175 = arith.constant 0 : index
    %c0_176 = arith.constant 0 : index
    %193 = vector.load %arg4[%c2_173, %c0_174, %c0_175, %c0_176] : memref<5x3x256x256xbf16, #tpu.memory_space<vmem>>, vector<1x1x256x256xbf16>
    %194 = vector.shape_cast %193 : vector<1x1x256x256xbf16> to vector<256x256xbf16>
    %cst_177 = arith.constant dense<0.000000e+00> : vector<16x256xf32>
    %195 = tpu.matmul %192, %194, %cst_177 {dimension_numbers = #tpu.dot_dimension_numbers<[1], [0], [0], [1], [0, 0, 1, 1], [], []>} : vector<16x256xbf16>, vector<256x256xbf16>, vector<16x256xf32> -> vector<16x256xf32>
    %196 = arith.addf %190, %195 : vector<16x256xf32>
    %c1_178 = arith.constant 1 : index
    %c0_179 = arith.constant 0 : index
    %197 = vector.load %arg9[%c1_178, %c0_179] : memref<18x256xf32, #tpu.memory_space<vmem>>, vector<16x256xf32>
    %198 = arith.truncf %197 : vector<16x256xf32> to vector<16x256xbf16>
    %c2_180 = arith.constant 2 : index
    %c1_181 = arith.constant 1 : index
    %c0_182 = arith.constant 0 : index
    %c0_183 = arith.constant 0 : index
    %199 = vector.load %arg4[%c2_180, %c1_181, %c0_182, %c0_183] : memref<5x3x256x256xbf16, #tpu.memory_space<vmem>>, vector<1x1x256x256xbf16>
    %200 = vector.shape_cast %199 : vector<1x1x256x256xbf16> to vector<256x256xbf16>
    %cst_184 = arith.constant dense<0.000000e+00> : vector<16x256xf32>
    %201 = tpu.matmul %198, %200, %cst_184 {dimension_numbers = #tpu.dot_dimension_numbers<[1], [0], [0], [1], [0, 0, 1, 1], [], []>} : vector<16x256xbf16>, vector<256x256xbf16>, vector<16x256xf32> -> vector<16x256xf32>
    %202 = arith.addf %196, %201 : vector<16x256xf32>
    %c2_185 = arith.constant 2 : index
    %c0_186 = arith.constant 0 : index
    %203 = vector.load %arg9[%c2_185, %c0_186] : memref<18x256xf32, #tpu.memory_space<vmem>>, vector<16x256xf32>
    %204 = arith.truncf %203 : vector<16x256xf32> to vector<16x256xbf16>
    %c2_187 = arith.constant 2 : index
    %c2_188 = arith.constant 2 : index
    %c0_189 = arith.constant 0 : index
    %c0_190 = arith.constant 0 : index
    %205 = vector.load %arg4[%c2_187, %c2_188, %c0_189, %c0_190] : memref<5x3x256x256xbf16, #tpu.memory_space<vmem>>, vector<1x1x256x256xbf16>
    %206 = vector.shape_cast %205 : vector<1x1x256x256xbf16> to vector<256x256xbf16>
    %cst_191 = arith.constant dense<0.000000e+00> : vector<16x256xf32>
    %207 = tpu.matmul %204, %206, %cst_191 {dimension_numbers = #tpu.dot_dimension_numbers<[1], [0], [0], [1], [0, 0, 1, 1], [], []>} : vector<16x256xbf16>, vector<256x256xbf16>, vector<16x256xf32> -> vector<16x256xf32>
    %208 = arith.addf %202, %207 : vector<16x256xf32>
    %209 = vector.broadcast %8 : vector<1x256xf32> to vector<16x256xf32>
    %210 = arith.addf %208, %209 : vector<16x256xf32>
    %c1_192 = arith.constant 1 : index
    %c0_193 = arith.constant 0 : index
    %211 = vector.load %arg9[%c1_192, %c0_193] : memref<18x256xf32, #tpu.memory_space<vmem>>, vector<16x256xf32>
    tpu.vector_store %arg9[%c1_192, %c0_193], %210 {strides = array<i32>} : memref<18x256xf32, #tpu.memory_space<vmem>>, vector<16x256xf32>,
    %cst_194 = arith.constant 0.000000e+00 : f32
    %212 = vector.broadcast %cst_194 : f32 to vector<16x256xf32>
    %c0_195 = arith.constant 0 : index
    %c0_196 = arith.constant 0 : index
    %213 = vector.load %arg8[%c0_195, %c0_196] : memref<18x256xf32, #tpu.memory_space<vmem>>, vector<16x256xf32>
    %214 = arith.truncf %213 : vector<16x256xf32> to vector<16x256xbf16>
    %c3_197 = arith.constant 3 : index
    %c0_198 = arith.constant 0 : index
    %c0_199 = arith.constant 0 : index
    %c0_200 = arith.constant 0 : index
    %215 = vector.load %arg4[%c3_197, %c0_198, %c0_199, %c0_200] : memref<5x3x256x256xbf16, #tpu.memory_space<vmem>>, vector<1x1x256x256xbf16>
    %216 = vector.shape_cast %215 : vector<1x1x256x256xbf16> to vector<256x256xbf16>
    %cst_201 = arith.constant dense<0.000000e+00> : vector<16x256xf32>
    %217 = tpu.matmul %214, %216, %cst_201 {dimension_numbers = #tpu.dot_dimension_numbers<[1], [0], [0], [1], [0, 0, 1, 1], [], []>} : vector<16x256xbf16>, vector<256x256xbf16>, vector<16x256xf32> -> vector<16x256xf32>
    %218 = arith.addf %212, %217 : vector<16x256xf32>
    %c0_202 = arith.constant 0 : index
    %c0_203 = arith.constant 0 : index
    %219 = vector.load %arg9[%c0_202, %c0_203] : memref<18x256xf32, #tpu.memory_space<vmem>>, vector<16x256xf32>
    %220 = arith.truncf %219 : vector<16x256xf32> to vector<16x256xbf16>
    %c4_204 = arith.constant 4 : index
    %c0_205 = arith.constant 0 : index
    %c0_206 = arith.constant 0 : index
    %c0_207 = arith.constant 0 : index
    %221 = vector.load %arg4[%c4_204, %c0_205, %c0_206, %c0_207] : memref<5x3x256x256xbf16, #tpu.memory_space<vmem>>, vector<1x1x256x256xbf16>
    %222 = vector.shape_cast %221 : vector<1x1x256x256xbf16> to vector<256x256xbf16>
    %cst_208 = arith.constant dense<0.000000e+00> : vector<16x256xf32>
    %223 = tpu.matmul %220, %222, %cst_208 {dimension_numbers = #tpu.dot_dimension_numbers<[1], [0], [0], [1], [0, 0, 1, 1], [], []>} : vector<16x256xbf16>, vector<256x256xbf16>, vector<16x256xf32> -> vector<16x256xf32>
    %224 = arith.addf %218, %223 : vector<16x256xf32>
    %c1_209 = arith.constant 1 : index
    %c0_210 = arith.constant 0 : index
    %225 = vector.load %arg8[%c1_209, %c0_210] : memref<18x256xf32, #tpu.memory_space<vmem>>, vector<16x256xf32>
    %226 = arith.truncf %225 : vector<16x256xf32> to vector<16x256xbf16>
    %c3_211 = arith.constant 3 : index
    %c1_212 = arith.constant 1 : index
    %c0_213 = arith.constant 0 : index
    %c0_214 = arith.constant 0 : index
    %227 = vector.load %arg4[%c3_211, %c1_212, %c0_213, %c0_214] : memref<5x3x256x256xbf16, #tpu.memory_space<vmem>>, vector<1x1x256x256xbf16>
    %228 = vector.shape_cast %227 : vector<1x1x256x256xbf16> to vector<256x256xbf16>
    %cst_215 = arith.constant dense<0.000000e+00> : vector<16x256xf32>
    %229 = tpu.matmul %226, %228, %cst_215 {dimension_numbers = #tpu.dot_dimension_numbers<[1], [0], [0], [1], [0, 0, 1, 1], [], []>} : vector<16x256xbf16>, vector<256x256xbf16>, vector<16x256xf32> -> vector<16x256xf32>
    %230 = arith.addf %224, %229 : vector<16x256xf32>
    %c1_216 = arith.constant 1 : index
    %c0_217 = arith.constant 0 : index
    %231 = vector.load %arg9[%c1_216, %c0_217] : memref<18x256xf32, #tpu.memory_space<vmem>>, vector<16x256xf32>
    %232 = arith.truncf %231 : vector<16x256xf32> to vector<16x256xbf16>
    %c4_218 = arith.constant 4 : index
    %c1_219 = arith.constant 1 : index
    %c0_220 = arith.constant 0 : index
    %c0_221 = arith.constant 0 : index
    %233 = vector.load %arg4[%c4_218, %c1_219, %c0_220, %c0_221] : memref<5x3x256x256xbf16, #tpu.memory_space<vmem>>, vector<1x1x256x256xbf16>
    %234 = vector.shape_cast %233 : vector<1x1x256x256xbf16> to vector<256x256xbf16>
    %cst_222 = arith.constant dense<0.000000e+00> : vector<16x256xf32>
    %235 = tpu.matmul %232, %234, %cst_222 {dimension_numbers = #tpu.dot_dimension_numbers<[1], [0], [0], [1], [0, 0, 1, 1], [], []>} : vector<16x256xbf16>, vector<256x256xbf16>, vector<16x256xf32> -> vector<16x256xf32>
    %236 = arith.addf %230, %235 : vector<16x256xf32>
    %c2_223 = arith.constant 2 : index
    %c0_224 = arith.constant 0 : index
    %237 = vector.load %arg8[%c2_223, %c0_224] : memref<18x256xf32, #tpu.memory_space<vmem>>, vector<16x256xf32>
    %238 = arith.truncf %237 : vector<16x256xf32> to vector<16x256xbf16>
    %c3_225 = arith.constant 3 : index
    %c2_226 = arith.constant 2 : index
    %c0_227 = arith.constant 0 : index
    %c0_228 = arith.constant 0 : index
    %239 = vector.load %arg4[%c3_225, %c2_226, %c0_227, %c0_228] : memref<5x3x256x256xbf16, #tpu.memory_space<vmem>>, vector<1x1x256x256xbf16>
    %240 = vector.shape_cast %239 : vector<1x1x256x256xbf16> to vector<256x256xbf16>
    %cst_229 = arith.constant dense<0.000000e+00> : vector<16x256xf32>
    %241 = tpu.matmul %238, %240, %cst_229 {dimension_numbers = #tpu.dot_dimension_numbers<[1], [0], [0], [1], [0, 0, 1, 1], [], []>} : vector<16x256xbf16>, vector<256x256xbf16>, vector<16x256xf32> -> vector<16x256xf32>
    %242 = arith.addf %236, %241 : vector<16x256xf32>
    %c2_230 = arith.constant 2 : index
    %c0_231 = arith.constant 0 : index
    %243 = vector.load %arg9[%c2_230, %c0_231] : memref<18x256xf32, #tpu.memory_space<vmem>>, vector<16x256xf32>
    %244 = arith.truncf %243 : vector<16x256xf32> to vector<16x256xbf16>
    %c4_232 = arith.constant 4 : index
    %c2_233 = arith.constant 2 : index
    %c0_234 = arith.constant 0 : index
    %c0_235 = arith.constant 0 : index
    %245 = vector.load %arg4[%c4_232, %c2_233, %c0_234, %c0_235] : memref<5x3x256x256xbf16, #tpu.memory_space<vmem>>, vector<1x1x256x256xbf16>
    %246 = vector.shape_cast %245 : vector<1x1x256x256xbf16> to vector<256x256xbf16>
    %cst_236 = arith.constant dense<0.000000e+00> : vector<16x256xf32>
    %247 = tpu.matmul %244, %246, %cst_236 {dimension_numbers = #tpu.dot_dimension_numbers<[1], [0], [0], [1], [0, 0, 1, 1], [], []>} : vector<16x256xbf16>, vector<256x256xbf16>, vector<16x256xf32> -> vector<16x256xf32>
    %248 = arith.addf %242, %247 : vector<16x256xf32>
    %249 = vector.broadcast %9 : vector<1x256xf32> to vector<16x256xf32>
    %250 = arith.addf %248, %249 : vector<16x256xf32>
    %cst_237 = arith.constant dense<0.000000e+00> : vector<256xf32>
    %251 = vector.multi_reduction <add>, %250, %cst_237 [0] : vector<16x256xf32> to vector<256xf32>
    %252 = vector.shape_cast %251 : vector<256xf32> to vector<1x256xf32>
    %253 = arith.mulf %250, %250 : vector<16x256xf32>
    %cst_238 = arith.constant dense<0.000000e+00> : vector<256xf32>
    %254 = vector.multi_reduction <add>, %253, %cst_238 [0] : vector<16x256xf32> to vector<256xf32>
    %255 = vector.shape_cast %254 : vector<256xf32> to vector<1x256xf32>
    %c0_239 = arith.constant 0 : index
    %c0_240 = arith.constant 0 : index
    %c0_241 = arith.constant 0 : index
    %256 = vector.load %arg5[%c0_239, %c0_240, %c0_241] : memref<2x256x256xf32, #tpu.memory_space<vmem>>, vector<1x256x256xf32>
    %257 = vector.shape_cast %256 : vector<1x256x256xf32> to vector<256x256xf32>
    %cst_242 = arith.constant dense<0.000000e+00> : vector<1x256xf32>
    %258 = tpu.matmul %252, %257, %cst_242 {dimension_numbers = #tpu.dot_dimension_numbers<[1], [0], [0], [1], [0, 0, 1, 1], [], []>} : vector<1x256xf32>, vector<256x256xf32>, vector<1x256xf32> -> vector<1x256xf32>
    %c0_243 = arith.constant 0 : index
    %c0_244 = arith.constant 0 : index
    %c0_245 = arith.constant 0 : index
    %259 = vector.load %arg5[%c0_243, %c0_244, %c0_245] : memref<2x256x256xf32, #tpu.memory_space<vmem>>, vector<1x256x256xf32>
    %260 = vector.shape_cast %259 : vector<1x256x256xf32> to vector<256x256xf32>
    %cst_246 = arith.constant dense<0.000000e+00> : vector<1x256xf32>
    %261 = tpu.matmul %255, %260, %cst_246 {dimension_numbers = #tpu.dot_dimension_numbers<[1], [0], [0], [1], [0, 0, 1, 1], [], []>} : vector<1x256xf32>, vector<256x256xf32>, vector<1x256xf32> -> vector<1x256xf32>
    %262 = arith.mulf %258, %258 : vector<1x256xf32>
    %263 = arith.subf %261, %262 : vector<1x256xf32>
    %cst_247 = arith.constant 0.000000e+00 : f32
    %264 = vector.broadcast %cst_247 : f32 to vector<1x256xf32>
    %265 = arith.maximumf %263, %264 : vector<1x256xf32>
    %266 = vector.broadcast %258 : vector<1x256xf32> to vector<16x256xf32>
    %267 = arith.subf %250, %266 : vector<16x256xf32>
    %cst_248 = arith.constant 9.99999974E-6 : f32
    %268 = vector.broadcast %cst_248 : f32 to vector<1x256xf32>
    %269 = arith.addf %265, %268 : vector<1x256xf32>
    %270 = math.rsqrt %269 : vector<1x256xf32>
    %271 = vector.broadcast %270 : vector<1x256xf32> to vector<16x256xf32>
    %272 = arith.mulf %267, %271 : vector<16x256xf32>
    %273 = vector.broadcast %10 : vector<1x256xf32> to vector<16x256xf32>
    %274 = arith.mulf %272, %273 : vector<16x256xf32>
    %275 = vector.broadcast %11 : vector<1x256xf32> to vector<16x256xf32>
    %276 = arith.addf %274, %275 : vector<16x256xf32>
    %277 = arith.negf %276 : vector<16x256xf32>
    %278 = math.exp %277 : vector<16x256xf32>
    %cst_249 = arith.constant 1.000000e+00 : f32
    %279 = vector.broadcast %cst_249 : f32 to vector<16x256xf32>
    %280 = arith.addf %279, %278 : vector<16x256xf32>
    %281 = arith.divf %279, %280 : vector<16x256xf32>
    %282 = arith.mulf %276, %281 : vector<16x256xf32>
    %c1_250 = arith.constant 1 : index
    %c0_251 = arith.constant 0 : index
    %c0_252 = arith.constant 0 : index
    %283 = vector.load %arg5[%c1_250, %c0_251, %c0_252] : memref<2x256x256xf32, #tpu.memory_space<vmem>>, vector<1x256x256xf32>
    %284 = vector.shape_cast %283 : vector<1x256x256xf32> to vector<256x256xf32>
    %cst_253 = arith.constant dense<0.000000e+00> : vector<16x256xf32>
    %285 = tpu.matmul %282, %284, %cst_253 {dimension_numbers = #tpu.dot_dimension_numbers<[1], [0], [0], [1], [0, 0, 1, 1], [], []>} : vector<16x256xf32>, vector<256x256xf32>, vector<16x256xf32> -> vector<16x256xf32>
    %286 = vector.broadcast %12 : vector<1x256xf32> to vector<16x256xf32>
    %287 = arith.addf %285, %286 : vector<16x256xf32>
    %288 = arith.negf %287 : vector<16x256xf32>
    %289 = math.exp %288 : vector<16x256xf32>
    %cst_254 = arith.constant 1.000000e+00 : f32
    %290 = vector.broadcast %cst_254 : f32 to vector<16x256xf32>
    %291 = arith.addf %290, %289 : vector<16x256xf32>
    %292 = arith.divf %290, %291 : vector<16x256xf32>
    %293 = arith.mulf %292, %210 : vector<16x256xf32>
    %294 = arith.addf %14, %293 : vector<16x256xf32>
    %c0_255 = arith.constant 0 : index
    %c0_256 = arith.constant 0 : index
    %c0_257 = arith.constant 0 : index
    %295 = vector.load %arg7[%c0_255, %c0_256, %c0_257] : memref<1x16x256xf32, #tpu.memory_space<vmem>>, vector<1x16x256xf32>
    %296 = vector.shape_cast %295 : vector<1x16x256xf32> to vector<16x256xf32>
    %297 = vector.shape_cast %294 : vector<16x256xf32> to vector<1x16x256xf32>
    tpu.vector_store %arg7[%c0_255, %c0_256, %c0_257], %297 {strides = array<i32>} : memref<1x16x256xf32, #tpu.memory_space<vmem>>, vector<1x16x256xf32>,
    return
  }
  func.func @transform_0(%arg0: i32) -> (i32, i32, i32) {
    %c0_i32 = arith.constant 0 : i32
    %c0_i32_0 = arith.constant 0 : i32
    %c0_i32_1 = arith.constant 0 : i32
    return %arg0, %c0_i32, %c0_i32_0 : i32, i32, i32
  }
  func.func @transform_1(%arg0: i32) -> (i32, i32, i32) {
    %c0_i32 = arith.constant 0 : i32
    %c0_i32_0 = arith.constant 0 : i32
    %c0_i32_1 = arith.constant 0 : i32
    return %arg0, %c0_i32, %c0_i32_0 : i32, i32, i32
  }
  func.func @transform_2(%arg0: i32) -> (i32, i32, i32) {
    %c0_i32 = arith.constant 0 : i32
    %c0_i32_0 = arith.constant 0 : i32
    %c0_i32_1 = arith.constant 0 : i32
    return %arg0, %c0_i32, %c0_i32_0 : i32, i32, i32
  }
  func.func @transform_3(%arg0: i32) -> (i32, i32, i32, i32) {
    %c0_i32 = arith.constant 0 : i32
    %c0_i32_0 = arith.constant 0 : i32
    %c0_i32_1 = arith.constant 0 : i32
    %c0_i32_2 = arith.constant 0 : i32
    %c0_i32_3 = arith.constant 0 : i32
    return %c0_i32, %c0_i32_0, %c0_i32_1, %c0_i32_2 : i32, i32, i32, i32
  }
  func.func @transform_4(%arg0: i32) -> (i32, i32, i32) {
    %c0_i32 = arith.constant 0 : i32
    %c0_i32_0 = arith.constant 0 : i32
    %c0_i32_1 = arith.constant 0 : i32
    %c0_i32_2 = arith.constant 0 : i32
    return %c0_i32, %c0_i32_0, %c0_i32_1 : i32, i32, i32
  }
  func.func @transform_5(%arg0: i32) -> (i32, i32) {
    %c0_i32 = arith.constant 0 : i32
    %c0_i32_0 = arith.constant 0 : i32
    %c0_i32_1 = arith.constant 0 : i32
    return %c0_i32, %c0_i32_0 : i32, i32
  }
  func.func @transform_6(%arg0: i32) -> (i32, i32, i32) {
    %c0_i32 = arith.constant 0 : i32
    %c0_i32_0 = arith.constant 0 : i32
    %c0_i32_1 = arith.constant 0 : i32
    return %arg0, %c0_i32, %c0_i32_0 : i32, i32, i32
  }
}

</mosaic_0001>

<llo_original>
// kernel: tile.83
$region0: #{tile.83}
  %s0 = inlined_call_operand.vmem [shape: f32[16,16], index: 0, kind: input, shape index: {}]
  %s1 = inlined_call_operand.vmem [shape: f32[1,256], index: 1, kind: output, shape index: {}]
  $region1: #{tile.83} parent=0
    #allocation0 [shape = 'u8[8192]{0}', space=vmem, size = 0x2000, scoped, tag = 'scoped mem for output reshape']
    %s2 = smov 3
    %v3 = vld [vmem:[%s0] ss:$8 sm:%s2]
    %vm4 = vcmask 130048
    %5 = vst.msk [vmem:[#allocation0] ss:$8 sm:$0x3] %vm4, %v3
    %s6 = scalar_lea.vmem %s0, 7
    %s7 = smov 3
    %v8 = vld [vmem:[%s6] ss:$8 sm:%s7]
    %9 = vrot.lane.b32.xlu0 %v8, 112
    %v10 = vpop.permute.xlu0 %9
    %vm11 = vcmask 1048448
    %12 = vst.msk [vmem:[#allocation0] ss:$8 sm:$0x3] %vm11, %v10
    %s13 = scalar_lea.vmem %s0, 6
    %s14 = smov 3
    %v15 = vld [vmem:[%s13] ss:$8 sm:%s14]
    %16 = vrot.lane.b32.xlu0 %v15, 96
    %v17 = vpop.permute.xlu0 %16
    %vm18 = vcmask 917248
    %19 = vst.msk [vmem:[#allocation0] ss:$8 sm:$0x3] %vm18, %v17
    %s20 = scalar_lea.vmem %s0, 5
    %s21 = smov 3
    %v22 = vld [vmem:[%s20] ss:$8 sm:%s21]
    %23 = vrot.lane.b32.xlu0 %v22, 80
    %v24 = vpop.permute.xlu0 %23
    %vm25 = vcmask 786048
    %26 = vst.msk [vmem:[#allocation0] ss:$8 sm:$0x3] %vm25, %v24
    %s27 = scalar_lea.vmem %s0, 4
    %s28 = smov 3
    %v29 = vld [vmem:[%s27] ss:$8 sm:%s28]
    %30 = vrot.lane.b32.xlu0 %v29, 64
    %v31 = vpop.permute.xlu0 %30
    %vm32 = vcmask 654848
    %33 = vst.msk [vmem:[#allocation0] ss:$8 sm:$0x3] %vm32, %v31
    %s34 = scalar_lea.vmem %s0, 3
    %s35 = smov 3
    %v36 = vld [vmem:[%s34] ss:$8 sm:%s35]
    %37 = vrot.lane.b32.xlu0 %v36, 48
    %v38 = vpop.permute.xlu0 %37
    %vm39 = vcmask 523648
    %40 = vst.msk [vmem:[#allocation0] ss:$8 sm:$0x3] %vm39, %v38
    %s41 = scalar_lea.vmem %s0, 2
    %s42 = smov 3
    %v43 = vld [vmem:[%s41] ss:$8 sm:%s42]
    %44 = vrot.lane.b32.xlu0 %v43, 32
    %v45 = vpop.permute.xlu0 %44
    %vm46 = vcmask 392448
    %47 = vst.msk [vmem:[#allocation0] ss:$8 sm:$0x3] %vm46, %v45
    %s48 = scalar_lea.vmem %s0, 1
    %s49 = smov 3
    %v50 = vld [vmem:[%s48] ss:$8 sm:%s49]
    %51 = vrot.lane.b32.xlu0 %v50, 16
    %v52 = vpop.permute.xlu0 %51
    %vm53 = vcmask 261248
    %54 = vst.msk [vmem:[#allocation0] ss:$8 sm:$0x3] %vm53, %v52
    %s56 = ssub.s32 2, 1
    %v57 = vld [vmem:[#allocation0] sm:%s56]
    %s59 = ssub.s32 2, 1
    %60 = vst [vmem:[%s1] sm:%s59] %v57
    %s61 = scalar_lea.vmem [#allocation0], 8
    %v62 = vld [vmem:[%s61] sm:%s56]
    %s64 = ssub.s32 2, 1
    %s65 = scalar_lea.vmem %s1, 1
    %66 = vst [vmem:[%s65] sm:%s64] %v62

</llo_original>
